<compile_context>
chip_gen: v7x
topology: tpu7x:2x2x1
jax: 0.10.0
libtpu: 0.0.40
codegen_flags: <defaults>
</compile_context>

<pallas_src>
import jax
import jax.numpy as jnp
from jax.experimental import pallas as pl
from jax.experimental.pallas import tpu as pltpu


def _round_up(x, m):
    return ((x + m - 1) // m) * m


def _round_down(x, m):
    return (x // m) * m


def _sublane_multiple(dtype):
    # f32 -> 8 rows per vreg, bf16 -> 16, int8/fp8 -> 32 (packed dtypes pack along sublanes).
    return max(8, 32 // jnp.dtype(dtype).itemsize)


# Per-step VMEM byte budget for the (double-buffered) input tiles, and the scoped-VMEM cap.
_VMEM_TILE_BUDGET = 24 << 20   # keeps the kernel near HBM roofline on v5e/v6e/v7x
_VMEM_LIMIT_CAP = 48 << 20     # < v7x 64 MiB physical VMEM, << v5e/v6e 128 MiB


def contrastive_loss(output1, output2, label, *, margin=2.0, eps=1e-6, tile_b=None):
    """Pallas TPU ContrastiveLoss forward.

    output1, output2: (B, D) embeddings (f32 or bf16; DMA'd in their native dtype)
    label:            (B,) or (B, 1); 1 = similar pair, 0 = dissimilar
    Returns the scalar mean contrastive loss (float32).
    """
    B, D = output1.shape
    assert output2.shape == (B, D)
    if label.ndim == 1:
        label = label[:, None]
    label = label.astype(jnp.float32)          # tiny array; keeps the label block layout simple

    o1_is = jnp.dtype(output1.dtype).itemsize
    o2_is = jnp.dtype(output2.dtype).itemsize
    sub_mult = max(_sublane_multiple(output1.dtype), _sublane_multiple(output2.dtype))

    # --- VMEM-byte-budgeted batch tile --------------------------------------------------
    # The lane axis pads to a multiple of 128 in VMEM, so budget with the padded width;
    # the (tile_b, 1) label column also pads to 128 lanes (f32).
    d_vmem = _round_up(D, 128)
    bytes_per_row_vmem = 2 * d_vmem * (o1_is + o2_is) + 2 * 128 * 4   # 2x = double buffering
    if tile_b is None:
        tile_b = _round_down(_VMEM_TILE_BUDGET // bytes_per_row_vmem, sub_mult)
    tile_b = max(sub_mult, _round_up(int(tile_b), sub_mult))
    tile_b = min(tile_b, _round_up(B, sub_mult))   # never pad a small batch up to the budget

    # --- Grid: (parallel partitions, reduction tiles per partition) ----------------------
    grid_b = pl.cdiv(B, tile_b)
    num_parallel = 2 if grid_b >= 2 else 1         # both TensorCores on v7x; harmless on 1-TC chips
    tiles_per_part = pl.cdiv(grid_b, num_parallel)
    b_pad = num_parallel * tiles_per_part * tile_b
    needs_mask = b_pad != B
    if needs_mask:
        pad = b_pad - B
        output1 = jnp.pad(output1, ((0, pad), (0, 0)))
        output2 = jnp.pad(output2, ((0, pad), (0, 0)))
        label = jnp.pad(label, ((0, pad), (0, 0)))

    margin = float(margin)
    eps = float(eps)

    def kernel(o1_ref, o2_ref, lab_ref, out_ref):
        i = pl.program_id(1)

        @pl.when(i == 0)
        def _init():
            out_ref[...] = jnp.zeros_like(out_ref)

        # Native-dtype DMA, upcast on the VPU (halves HBM traffic for bf16 embeddings).
        o1 = o1_ref[...].astype(jnp.float32)
        o2 = o2_ref[...].astype(jnp.float32)
        diff = (o1 - o2) + eps                                      # (tile_b, D)
        d2 = jnp.sum(diff * diff, axis=-1, keepdims=True)           # (tile_b, 1)
        d = jnp.sqrt(d2)
        hinge = jnp.maximum(margin - d, 0.0)
        lab = lab_ref[...]                                          # (tile_b, 1)
        per_row = lab * d2 + (1.0 - lab) * (hinge * hinge)          # (tile_b, 1)

        if needs_mask:   # trace-time gate: only pay iota/compare/select when padding exists
            c = pl.program_id(0)
            start = (c * tiles_per_part + i) * tile_b
            row = jax.lax.broadcasted_iota(jnp.int32, (tile_b, 1), 0) + start
            per_row = jnp.where(row < B, per_row, 0.0)

        # Accumulate this tile's partial into the partition's lane-dense (1, 128) block
        # (the (1,1) partial broadcasts across the lanes; the wrapper reads lane 0).
        out_ref[...] += jnp.sum(per_row, axis=0, keepdims=True)

    flops = 4 * b_pad * D + 8 * b_pad
    bytes_accessed = b_pad * D * (o1_is + o2_is) + b_pad * 4 + num_parallel * 128 * 4
    vmem_need = tile_b * bytes_per_row_vmem + (64 << 10)
    vmem_limit = int(min(_VMEM_LIMIT_CAP, max(32 << 20, vmem_need + (4 << 20))))

    tile_map = lambda c, i: (c * tiles_per_part + i, 0)

    out = pl.pallas_call(
        kernel,
        out_shape=jax.ShapeDtypeStruct((1, num_parallel * 128), jnp.float32),
        grid_spec=pltpu.PrefetchScalarGridSpec(
            num_scalar_prefetch=0,
            grid=(num_parallel, tiles_per_part),
            in_specs=[
                pl.BlockSpec((tile_b, D), tile_map),    # output1 tile (native dtype)
                pl.BlockSpec((tile_b, D), tile_map),    # output2 tile (native dtype)
                pl.BlockSpec((tile_b, 1), tile_map),    # label tile (f32)
            ],
            # Resident per-partition accumulator: one 128-lane block per parallel partition.
            out_specs=pl.BlockSpec((1, 128), lambda c, i: (0, c)),
        ),
        compiler_params=pltpu.CompilerParams(
            dimension_semantics=("parallel", "arbitrary"),
            vmem_limit_bytes=vmem_limit,
        ),
        cost_estimate=pl.CostEstimate(
            flops=flops, transcendentals=b_pad, bytes_accessed=bytes_accessed
        ),
    )(output1, output2, label)

    partials = out.reshape(num_parallel, 128)[:, 0]
    return jnp.sum(partials) * (1.0 / float(B))


def reference_contrastive_loss(o1, o2, label, *, margin=2.0, eps=1e-6):
    o1 = o1.astype(jnp.float32)
    o2 = o2.astype(jnp.float32)
    if label.ndim == 1:
        label = label[:, None]
    label = label.astype(jnp.float32)
    d = jnp.sqrt(jnp.sum((o1 - o2 + eps) ** 2, axis=-1, keepdims=True))
    hinge = jnp.maximum(margin - d, 0.0)
    return jnp.mean(label * d * d + (1.0 - label) * hinge * hinge)


if __name__ == "__main__":
    key = jax.random.PRNGKey(0)
    ks = jax.random.split(key, 12)
    margin = 2.0

    # Case 1: tiny f32 batch, single tile, no padding.
    o1 = jax.random.normal(ks[0], (8, 8), jnp.float32)
    o2 = jax.random.normal(ks[1], (8, 8), jnp.float32)
    lab = (jax.random.uniform(ks[2], (8, 1)) < 0.5).astype(jnp.float32)
    loss = jax.block_until_ready(contrastive_loss(o1, o2, lab, margin=margin))
    ref = reference_contrastive_loss(o1, o2, lab, margin=margin)
    assert loss.shape == ()
    assert jnp.allclose(loss, ref, atol=1e-5, rtol=1e-5), (loss, ref)

    # Case 2: ragged batch + 1-D label (zero-pad / tail-mask path).
    o1 = jax.random.normal(ks[3], (11, 8), jnp.float32)
    o2 = jax.random.normal(ks[4], (11, 8), jnp.float32)
    lab = (jax.random.uniform(ks[5], (11,)) < 0.5).astype(jnp.float32)
    loss = jax.block_until_ready(contrastive_loss(o1, o2, lab, margin=margin))
    ref = reference_contrastive_loss(o1, o2, lab, margin=margin)
    assert jnp.allclose(loss, ref, atol=1e-5, rtol=1e-5), (loss, ref)

    # Case 3: multi-tile grid -> two-partition "parallel" split + ragged tail.
    o1 = jax.random.normal(ks[6], (300, 32), jnp.float32)
    o2 = jax.random.normal(ks[7], (300, 32), jnp.float32)
    lab = (jax.random.uniform(ks[8], (300, 1)) < 0.5).astype(jnp.float32)
    loss = jax.block_until_ready(contrastive_loss(o1, o2, lab, margin=margin, tile_b=64))
    ref = reference_contrastive_loss(o1, o2, lab, margin=margin)
    assert jnp.allclose(loss, ref, atol=1e-5, rtol=1e-5), (loss, ref)

    # Case 4: bf16 embeddings (native-dtype DMA + in-kernel upcast, 16-row sublane multiple).
    o1 = jax.random.normal(ks[9], (64, 128), jnp.float32).astype(jnp.bfloat16)
    o2 = jax.random.normal(ks[10], (64, 128), jnp.float32).astype(jnp.bfloat16)
    lab = (jax.random.uniform(ks[11], (64, 1)) < 0.5).astype(jnp.float32)
    loss = jax.block_until_ready(contrastive_loss(o1, o2, lab, margin=margin, tile_b=32))
    ref = reference_contrastive_loss(o1, o2, lab, margin=margin)
    assert jnp.allclose(loss, ref, atol=1e-4, rtol=1e-4), (loss, ref)

    print("KERNEL_OK")
</pallas_src>

<mosaic_0001>
module attributes {stable_mosaic.version = 11 : i64} {
  func.func @kernel(%arg0: i32, %arg1: i32, %arg2: memref<8x8xf32, #tpu.memory_space<vmem>>, %arg3: memref<8x8xf32, #tpu.memory_space<vmem>>, %arg4: memref<8x1xf32, #tpu.memory_space<vmem>>, %arg5: memref<1x128xf32, #tpu.memory_space<vmem>>) attributes {dimension_semantics = [#tpu.dimension_semantics<parallel>, #tpu.dimension_semantics<arbitrary>], iteration_bounds = array<i64: 1, 1>, scalar_prefetch = 0 : i64, scratch_operands = 0 : i64, tpu.core_type = #tpu.core_type<tc>, window_params = [{transform_indices = @transform_0, window_bounds = array<i64: 8, 8>}, {transform_indices = @transform_1, window_bounds = array<i64: 8, 8>}, {transform_indices = @transform_2, window_bounds = array<i64: 8, 1>}, {transform_indices = @transform_3, window_bounds = array<i64: 1, 128>}]} {
    %c0_i32 = arith.constant 0 : i32
    %0 = arith.cmpi eq, %arg1, %c0_i32 : i32
    %1 = arith.extui %0 : i1 to i32
    %c0_i32_0 = arith.constant 0 : i32
    %2 = arith.cmpi ne, %1, %c0_i32_0 : i32
    scf.if %2 {
      %cst_15 = arith.constant 0.000000e+00 : f32
      %29 = vector.broadcast %cst_15 : f32 to vector<1x128xf32>
      %c0_16 = arith.constant 0 : index
      %c0_17 = arith.constant 0 : index
      %30 = vector.load %arg5[%c0_16, %c0_17] : memref<1x128xf32, #tpu.memory_space<vmem>>, vector<1x128xf32>
      tpu.vector_store %arg5[%c0_16, %c0_17], %29 {strides = array<i32>} : memref<1x128xf32, #tpu.memory_space<vmem>>, vector<1x128xf32>,
    } else {
    }
    %c0 = arith.constant 0 : index
    %c0_1 = arith.constant 0 : index
    %3 = vector.load %arg2[%c0, %c0_1] : memref<8x8xf32, #tpu.memory_space<vmem>>, vector<8x8xf32>
    %c0_2 = arith.constant 0 : index
    %c0_3 = arith.constant 0 : index
    %4 = vector.load %arg3[%c0_2, %c0_3] : memref<8x8xf32, #tpu.memory_space<vmem>>, vector<8x8xf32>
    %5 = arith.subf %3, %4 : vector<8x8xf32>
    %cst = arith.constant 9.99999997E-7 : f32
    %6 = vector.broadcast %cst : f32 to vector<8x8xf32>
    %7 = arith.addf %5, %6 : vector<8x8xf32>
    %8 = arith.mulf %7, %7 : vector<8x8xf32>
    %cst_4 = arith.constant dense<0.000000e+00> : vector<8xf32>
    %9 = vector.multi_reduction <add>, %8, %cst_4 [1] : vector<8x8xf32> to vector<8xf32>
    %10 = vector.shape_cast %9 : vector<8xf32> to vector<8x1xf32>
    %11 = math.sqrt %10 : vector<8x1xf32>
    %cst_5 = arith.constant 2.000000e+00 : f32
    %12 = vector.broadcast %cst_5 : f32 to vector<8x1xf32>
    %13 = arith.subf %12, %11 : vector<8x1xf32>
    %cst_6 = arith.constant 0.000000e+00 : f32
    %14 = vector.broadcast %cst_6 : f32 to vector<8x1xf32>
    %15 = arith.maximumf %13, %14 : vector<8x1xf32>
    %c0_7 = arith.constant 0 : index
    %c0_8 = arith.constant 0 : index
    %16 = vector.load %arg4[%c0_7, %c0_8] : memref<8x1xf32, #tpu.memory_space<vmem>>, vector<8x1xf32>
    %17 = arith.mulf %16, %10 : vector<8x1xf32>
    %cst_9 = arith.constant 1.000000e+00 : f32
    %18 = vector.broadcast %cst_9 : f32 to vector<8x1xf32>
    %19 = arith.subf %18, %16 : vector<8x1xf32>
    %20 = arith.mulf %15, %15 : vector<8x1xf32>
    %21 = arith.mulf %19, %20 : vector<8x1xf32>
    %22 = arith.addf %17, %21 : vector<8x1xf32>
    %c0_10 = arith.constant 0 : index
    %c0_11 = arith.constant 0 : index
    %23 = vector.load %arg5[%c0_10, %c0_11] : memref<1x128xf32, #tpu.memory_space<vmem>>, vector<1x128xf32>
    %cst_12 = arith.constant dense<0.000000e+00> : vector<1xf32>
    %24 = vector.multi_reduction <add>, %22, %cst_12 [0] : vector<8x1xf32> to vector<1xf32>
    %25 = vector.shape_cast %24 : vector<1xf32> to vector<1x1xf32>
    %26 = vector.broadcast %25 : vector<1x1xf32> to vector<1x128xf32>
    %27 = arith.addf %23, %26 : vector<1x128xf32>
    %c0_13 = arith.constant 0 : index
    %c0_14 = arith.constant 0 : index
    %28 = vector.load %arg5[%c0_13, %c0_14] : memref<1x128xf32, #tpu.memory_space<vmem>>, vector<1x128xf32>
    tpu.vector_store %arg5[%c0_13, %c0_14], %27 {strides = array<i32>} : memref<1x128xf32, #tpu.memory_space<vmem>>, vector<1x128xf32>,
    return
  }
  func.func @transform_0(%arg0: i32, %arg1: i32) -> (i32, i32) {
    %c1_i32 = arith.constant 1 : i32
    %0 = arith.muli %arg0, %c1_i32 : i32
    %1 = arith.addi %0, %arg1 : i32
    %c0_i32 = arith.constant 0 : i32
    %c0_i32_0 = arith.constant 0 : i32
    return %1, %c0_i32 : i32, i32
  }
  func.func @transform_1(%arg0: i32, %arg1: i32) -> (i32, i32) {
    %c1_i32 = arith.constant 1 : i32
    %0 = arith.muli %arg0, %c1_i32 : i32
    %1 = arith.addi %0, %arg1 : i32
    %c0_i32 = arith.constant 0 : i32
    %c0_i32_0 = arith.constant 0 : i32
    return %1, %c0_i32 : i32, i32
  }
  func.func @transform_2(%arg0: i32, %arg1: i32) -> (i32, i32) {
    %c1_i32 = arith.constant 1 : i32
    %0 = arith.muli %arg0, %c1_i32 : i32
    %1 = arith.addi %0, %arg1 : i32
    %c0_i32 = arith.constant 0 : i32
    %c0_i32_0 = arith.constant 0 : i32
    return %1, %c0_i32 : i32, i32
  }
  func.func @transform_3(%arg0: i32, %arg1: i32) -> (i32, i32) {
    %c0_i32 = arith.constant 0 : i32
    %c0_i32_0 = arith.constant 0 : i32
    return %c0_i32, %arg0 : i32, i32
  }
}

</mosaic_0001>

<llo_original>
// kernel: tpu_custom_call.1
$region0: #{tpu_custom_call.1}
  #allocation0 [shape = 'u32[]', space=smem, size = 0x4, offset = 0x4, fixed_abs, tag = 'smem constant byte address 0x4 - core index']
  #allocation1 [shape = 'u32[144,128]{1,0:T(1,128)}', space=vmem, size = 0x12000, scoped, tag = 'internal scratch']
  %s0 = inlined_call_operand.vmem [shape: f32[8,8], index: 0, kind: input, shape index: {}]
  %s1 = inlined_call_operand.hbm [shape: f32[8,8], index: 1, kind: input, shape index: {}]
  %s2 = inlined_call_operand.vmem [shape: f32[8,1], index: 2, kind: input, shape index: {}]
  %s3 = inlined_call_operand.hbm [shape: f32[1,128], index: 3, kind: output, shape index: {}]
  %s4 = sld [smem:[#allocation0]]
  $region30: #{tpu_custom_call.1} parent=0
    _
  %s6 = ssub.s32 1, %s4
  %s7 = scalar_select 0, %s6, %s4
  $region1: #{tpu_custom_call.1} parent=0
    #allocation2 [shape = 'u8[4096]{0}', space=vmem, size = 0x1000, scoped, tag = 'input window, operand 1, single buffered']
    #allocation3 [shape = 's32[1]{0}', space=sflag, size = 0x4, scoped, tag = 'scoped memory for tpu_custom_call.1']
    #allocation4 [shape = 's32[1]{0}', space=sflag, size = 0x4, scoped, tag = 'scoped memory for tpu_custom_call.1']
    #allocation5 [shape = 'u8[512]{0}', space=vmem, size = 0x400, scoped, tag = 'output window, operand 0, single buffered']
    %8 = vsyncpa [#allocation3], 0
    %9 = vsyncpa [#allocation4], 0
    // Predicated region
    $region2: #{tpu_custom_call.1} parent=1 // pred_check
      _
    $region3: #{tpu_custom_call.1} parent=1 // pred_check_branch
      %11 = sbr.rel (0) target = $region5
    $region4: #{tpu_custom_call.1} parent=1 // pred_region
      %s12 = sadd.s32 0, 0
      %p13 = scmp.lt.s32.totalorder %s12, 0
      %s14 = scalar_select %p13, %s12, 0
      %s15 = smul.addr %s14, 8
      %s16 = scalar_lea.vmem %s0, %s15
      %s17 = sadd.s32 0, 0
    $region5: #{tpu_custom_call.1} parent=1 // pred_fallthru
      _
    // Predicated region
    $region6: #{tpu_custom_call.1} parent=1 // pred_check
      _
    $region7: #{tpu_custom_call.1} parent=1 // pred_check_branch
      %19 = sbr.rel (0) target = $region9
    $region8: #{tpu_custom_call.1} parent=1 // pred_region
      %s20 = sadd.s32 0, 0
      %s22 = ssub.s32 128, 128
      %23 = vsyncadd [#allocation3], %s22
      %s24 = smul.addr %s20, 128
      %s25 = scalar_lea.hbm %s1, %s24
      %s27 = sshll.u32 [#allocation2], 4
      %s28 = int_to_ptr.vmem [resolvable:$true] %s27
      %30 = dma.hbm_to_vmem [thread:$0]  %s25, 128, %s28, [#allocation3]
    $region9: #{tpu_custom_call.1} parent=1 // pred_fallthru
      _
    // Predicated region
    $region10: #{tpu_custom_call.1} parent=1 // pred_check
      _
    $region11: #{tpu_custom_call.1} parent=1 // pred_check_branch
      %32 = sbr.rel (0) target = $region13
    $region12: #{tpu_custom_call.1} parent=1 // pred_region
      %s33 = sadd.s32 0, 0
      %p34 = scmp.lt.s32.totalorder %s33, 0
      %s35 = scalar_select %p34, %s33, 0
      %s36 = smul.addr %s35, 8
      %s37 = scalar_lea.vmem %s2, %s36
      %s38 = sadd.s32 0, 0
    $region13: #{tpu_custom_call.1} parent=1 // pred_fallthru
      _
    // Predicated region
    $region14: #{tpu_custom_call.1} parent=1 // pred_check
      _
    $region15: #{tpu_custom_call.1} parent=1 // pred_check_branch
      %40 = sbr.rel (0) target = $region17
    $region16: #{tpu_custom_call.1} parent=1 // pred_region
      %41 = dma.done [#allocation3], 128
    $region17: #{tpu_custom_call.1} parent=1 // pred_fallthru
      _
    %s42 = sadd.s32 0, 0
    %p43 = scmp.lt.s32.totalorder %s42, 0
    %s44 = scalar_select %p43, %s42, 0
    %s45 = smul.addr %s44, 8
    %s46 = scalar_lea.vmem %s0, %s45
    %s47 = sadd.s32 0, 0
    %p48 = scmp.lt.s32.totalorder %s47, 0
    %s49 = scalar_select %p48, %s47, 0
    %s50 = smul.addr %s49, 8
    %s51 = scalar_lea.vmem %s2, %s50
    %s52 = sadd.s32 0, 0
    %p53 = scmp.lt.s32.totalorder %s52, 0
    %s54 = scalar_select %p53, %s52, 0
    %s55 = smul.addr %s54, 8
    %s56 = scalar_lea.vmem %s0, %s55
    %s57 = sadd.s32 0, 0
    %s58 = sadd.s32 0, 0
    %s59 = sadd.s32 0, 0
    %p60 = scmp.lt.s32.totalorder %s59, 0
    %s61 = scalar_select %p60, %s59, 0
    %s62 = smul.addr %s61, 8
    %s63 = scalar_lea.vmem %s2, %s62
    %s64 = sadd.s32 0, 0
    %p65 = scmp.eq.s32.totalorder 0, 0
    // Predicated region
    $region18: #{tpu_custom_call.1} parent=1 // pred_check
      %p66 = pneg %p65
    $region19: #{tpu_custom_call.1} parent=1 // pred_check_branch
      %68 = sbr.rel (%p66) target = $region21
    $region20: #{tpu_custom_call.1} parent=1 // pred_region
      %69 = vst [vmem:[#allocation5] sm:$0x1] 0.0
    $region21: #{tpu_custom_call.1} parent=1 // pred_fallthru
      _
    %v70 = vld [vmem:[%s56] sm:$0xff]
    %v71 = vld [vmem:[#allocation2] sm:$0xff]
    %v72 = vsub.f32 %v70, %v71
    %v73 = vadd.f32 %v72, 1e-06
    %v74 = vmul.f32 %v73, %v73
    %vm75 = vcmask 64512
    %v76 = vsel %vm75, %v74, 0.0
    %77 = vadd.xlane.f32.xlu0 %v76
    %v78 = vpop.xlane.xlu0 %77
    %v79 = vrsqrt.pop %v78
    %v80 = vmul.f32 %v78, %v79
    %vm81 = vcmp.eq.f32.partialorder %v78, inf
    %v82 = vsel %vm81, %v78, %v80
    %vm83 = vcmp.eq.f32.partialorder %v78, 0.0
    %v84 = vand.u32 %v78, 2147483648
    %v85 = vsel %vm83, %v84, %v82
    %v86 = vsub.f32 2.0, %v85
    %v87 = vmax.f32 %v86, 0.0
    %v88 = vld [vmem:[%s63] sm:$0xff]
    %v89 = vmul.f32 %v88, %v78
    %v90 = vsub.f32 1.0, %v88
    %v91 = vmul.f32 %v87, %v87
    %v92 = vmul.f32 %v90, %v91
    %v93 = vadd.f32 %v89, %v92
    %v94 = vld [vmem:[#allocation5] sm:$0x1]
    %vm95 = vcmask 7168
    %v96 = vsel %vm95, %v93, 0.0
    %v97 = vrot.slane %v96, 4
    %v98 = vadd.f32 %v96, %v97
    %v99 = vrot.slane %v98, 2
    %v100 = vadd.f32 %v98, %v99
    %v101 = vrot.slane %v100, 1
    %v102 = vadd.f32 %v100, %v101
    %104 = vset.pattern.permute.xlu0 0
    %105 = vperm.xlu0 %104, %v102
    %v106 = vpop.permute.xlu0 %105
    %v108 = vadd.f32 %v94, %v106
    %109 = vst [vmem:[#allocation5] sm:$0x1] %v108
    // Predicated region
    $region22: #{tpu_custom_call.1} parent=1 // pred_check
      _
    $region23: #{tpu_custom_call.1} parent=1 // pred_check_branch
      %111 = sbr.rel (0) target = $region25
    $region24: #{tpu_custom_call.1} parent=1 // pred_region
      %s113 = ssub.s32 16, 16
      %114 = vsyncadd [#allocation4], %s113
      %s116 = sshll.u32 [#allocation5], 4
      %s117 = int_to_ptr.vmem [resolvable:$true] %s116
      %119 = dma.vmem_to_hbm [thread:$0]  %s117, 16, %s3, [#allocation4]
    $region25: #{tpu_custom_call.1} parent=1 // pred_fallthru
      _
    // Predicated region
    $region26: #{tpu_custom_call.1} parent=1 // pred_check
      _
    $region27: #{tpu_custom_call.1} parent=1 // pred_check_branch
      %121 = sbr.rel (0) target = $region29
    $region28: #{tpu_custom_call.1} parent=1 // pred_region
      %122 = dma.done [#allocation4], 16
    $region29: #{tpu_custom_call.1} parent=1 // pred_fallthru
      _
    %123 = vsyncpa [#allocation3], 1
    %124 = vsyncpa [#allocation4], 1

</llo_original>
